<compile_context>
chip_gen: v5e
topology: v5e:2x2
jax: 0.10.0
libtpu: 0.0.40
codegen_flags: <defaults>
</compile_context>

<pallas_src>
import jax
import jax.numpy as jnp
from jax.experimental import pallas as pl
from jax.experimental.pallas import tpu as pltpu


# ----------------------------- Pallas kernel --------------------------------
def maglap_kernel(xin_ref, w_ref, b_ref, out_ref):
    bf16, f32 = jnp.bfloat16, jnp.float32
    cin = xin_ref.shape[1]          # 2*max_freqs + d_model_aggr  (= 32)
    d_out = out_ref.shape[1]        # dim_emb - d_model_aggr      (= 16)

    # Static row offsets into the packed weight slab (all multiples of 8).
    o1 = 0                          # W1e   expanded element layer-1   (cin, 128)
    o2 = o1 + cin                   # W2bd  block-diag element layer-2 (128, 128)
    o3 = o2 + 128                   # wr1   aggregate layer-1          (128, 128)
    o4 = o3 + 128                   # wr2   aggregate layer-2          (128, 128)
    o5 = o4 + 128                   # wx    linear_x                   (cin, 128)

    xin = xin_ref[...]              # (T, cin) bf16 : [eig_re | eig_im | x]

    w_l1 = w_ref[o1:o2, :]
    w_l2 = w_ref[o2:o3, :]
    w_r1 = w_ref[o3:o4, :]
    w_r2 = w_ref[o4:o5, :]
    w_x = w_ref[o5:o5 + cin, :]

    b1 = b_ref[0:1, :]              # (1, 128) f32, zero-padded biases
    b2 = b_ref[1:2, :]
    br1 = b_ref[2:3, :]
    br2 = b_ref[3:4, :]
    bx = b_ref[4:5, :]

    dot = lambda a, b: jnp.dot(a, b, preferred_element_type=f32)

    # Element MLP layer 1 (shared across SignNet branches: f1(-v) = -f1(v)).
    z = dot(xin, w_l1)                                   # (T, 128) f32

    def layer2(h1_f32):
        h = dot(h1_f32.astype(bf16), w_l2) + b2          # (T, 128) f32
        return jnp.maximum(h, 0.0)

    # SignNet symmetrization: f(v) + f(-v); layer-1 matmul reused for both.
    trans = layer2(jnp.maximum(z + b1, 0.0)) + layer2(jnp.maximum(b1 - z, 0.0))

    # re_aggregate_mlp: Linear+ReLU, Linear+ReLU — lane-dense 128-wide matmuls.
    h = jnp.maximum(dot(trans.astype(bf16), w_r1) + br1, 0.0)
    h = jnp.maximum(dot(h.astype(bf16), w_r2) + br2, 0.0)

    # expand_x: linear_x(batch.x); only the x slice of xin hits non-zero w_x rows.
    hx = dot(xin, w_x) + bx

    out_ref[...] = (hx + h)[:, :d_out].astype(out_ref.dtype)


# --------------------------- host-side weight packing ------------------------
def pack_params(params, *, max_freqs):
    """Pack all weights into one bf16 (Ktot, 128) slab and one f32 (8, 128) bias slab."""
    f32 = jnp.float32
    F = max_freqs
    w1, b1 = params["w1"], params["b1"]          # (2, D), (1, D)
    w2, b2 = params["w2"], params["b2"]          # (D, D), (1, D)
    wr1, br1 = params["wr1"], params["br1"]      # (F*D, A), (1, A)
    wr2, br2 = params["wr2"], params["br2"]      # (A, A), (1, A)
    wx, bx = params["wx"], params["bx"]          # (A, d_x), (1, d_x)

    D = w1.shape[1]
    FD = F * D
    A = wr1.shape[1]
    d_x = wx.shape[1]
    cin = 2 * F + A
    C = 128
    assert FD <= C and A <= C and d_x <= C and cin <= C, "config exceeds 128-lane packing"

    eye_f = jnp.eye(F, dtype=f32)
    # W1e[f, f*D+d] = w1[0, d];  W1e[F+f, f*D+d] = w1[1, d]
    w1e = jnp.concatenate([jnp.kron(eye_f, w1[0:1, :]),
                           jnp.kron(eye_f, w1[1:2, :])], axis=0)     # (2F, FD)
    # Block-diagonal layer-2 weight (F copies of w2).
    w2bd = jnp.kron(eye_f, w2)                                        # (FD, FD)

    def pad(m, rows):
        out = jnp.zeros((rows, C), f32)
        return out.at[: m.shape[0], : m.shape[1]].set(m)

    w_l1 = pad(w1e, cin)                                   # x-rows stay zero
    w_l2 = pad(w2bd, 128)
    w_r1 = pad(wr1, 128)
    w_r2 = pad(wr2, 128)
    w_x = jnp.zeros((cin, C), f32).at[2 * F:2 * F + A, :d_x].set(wx)  # eig-rows zero

    w_slab = jnp.concatenate([w_l1, w_l2, w_r1, w_r2, w_x], axis=0).astype(jnp.bfloat16)

    b_slab = jnp.zeros((8, C), f32)
    b_slab = b_slab.at[0, :FD].set(jnp.tile(b1, (1, F))[0])
    b_slab = b_slab.at[1, :FD].set(jnp.tile(b2, (1, F))[0])
    b_slab = b_slab.at[2, :A].set(br1[0])
    b_slab = b_slab.at[3, :A].set(br2[0])
    b_slab = b_slab.at[4, :d_x].set(bx[0])
    return w_slab, b_slab


# ------------------------------ wrapper --------------------------------------
def maglap_forward(eig_re, eig_im, x, params, *, tile_n=512):
    N, F = eig_re.shape
    A = x.shape[1]
    d_x = params["wx"].shape[1]
    cin = 2 * F + A

    # Single concatenated node-major input stream, bf16 for the MXU / HBM bytes.
    xin = jnp.concatenate([eig_re, eig_im, x], axis=1).astype(jnp.bfloat16)

    # Tile the node axis; pad to a multiple of the tile (handles arbitrary N).
    tile_n = max(16, pl.cdiv(min(tile_n, N), 16) * 16)
    n_pad = pl.cdiv(N, tile_n) * tile_n
    if n_pad != N:
        xin = jnp.pad(xin, ((0, n_pad - N), (0, 0)))

    w_slab, b_slab = pack_params(params, max_freqs=F)

    grid = (n_pad // tile_n,)
    out = pl.pallas_call(
        maglap_kernel,
        out_shape=jax.ShapeDtypeStruct((n_pad, d_x), jnp.float32),
        grid=grid,
        in_specs=[
            pl.BlockSpec((tile_n, cin), lambda i: (i, 0)),       # packed [re|im|x]
            pl.BlockSpec(w_slab.shape, lambda i: (0, 0)),        # packed weights (bf16)
            pl.BlockSpec(b_slab.shape, lambda i: (0, 0)),        # packed biases (f32)
        ],
        out_specs=pl.BlockSpec((tile_n, d_x), lambda i: (i, 0)),
        compiler_params=pltpu.CompilerParams(
            dimension_semantics=("parallel",)),
    )(xin, w_slab, b_slab)
    return out[:N]


# --------------------------- pure-JAX reference -------------------------------
def maglap_reference(eig_re, eig_im, x, p):
    # Mirrors the kernel's mixed-precision policy: every matmul operand is
    # rounded to bf16 (inputs, weights, intermediate activations); bias adds,
    # ReLU and accumulation are f32.
    bf = lambda a: a.astype(jnp.bfloat16).astype(jnp.float32)
    re, im, xb = bf(eig_re), bf(eig_im), bf(x)
    w1, w2 = bf(p["w1"]), bf(p["w2"])
    wr1, wr2, wx = bf(p["wr1"]), bf(p["wr2"]), bf(p["wx"])

    z = re[..., None] * w1[0] + im[..., None] * w1[1]          # (N, F, D)

    def branch(zz):
        h = jnp.maximum(zz + p["b1"][0], 0.0)
        h = bf(h) @ w2 + p["b2"][0]
        return jnp.maximum(h, 0.0)

    trans = branch(z) + branch(-z)                             # SignNet f(v)+f(-v)
    trans = trans.reshape(trans.shape[0], -1)                  # (N, F*D)
    h = jnp.maximum(bf(trans) @ wr1 + p["br1"][0], 0.0)
    h = jnp.maximum(bf(h) @ wr2 + p["br2"][0], 0.0)
    hx = xb @ wx + p["bx"][0]
    return hx + h


# ------------------------------ parameters ------------------------------------
def init_params(key, *, d_model_elem, d_model_aggr, max_freqs, dim_emb):
    D = 2 * d_model_elem               # element MLP width (consider_im_part=True)
    A = d_model_aggr
    flat = 2 * d_model_elem * max_freqs
    d_x = dim_emb - d_model_aggr

    def linear(k, fan_in, fan_out):
        kw, kb = jax.random.split(k)
        bound = 1.0 / jnp.sqrt(fan_in)
        w = jax.random.uniform(kw, (fan_in, fan_out), jnp.float32, -bound, bound)
        b = jax.random.uniform(kb, (1, fan_out), jnp.float32, -bound, bound)
        return w, b

    ks = jax.random.split(key, 5)
    w1, b1 = linear(ks[0], 2, D)            # element_mlp layer 1
    w2, b2 = linear(ks[1], D, D)            # element_mlp layer 2
    wr1, br1 = linear(ks[2], flat, A)       # re_aggregate_mlp layer 1
    wr2, br2 = linear(ks[3], A, A)          # re_aggregate_mlp layer 2
    wx, bx = linear(ks[4], A, d_x)          # linear_x (expand_x)
    return dict(w1=w1, b1=b1, w2=w2, b2=b2,
                wr1=wr1, br1=br1, wr2=wr2, br2=br2, wx=wx, bx=bx)


# --------------------------------- main ---------------------------------------
if __name__ == "__main__":
    # config
    d_model_elem, d_model_aggr, max_freqs, dim_emb = 4, 16, 8, 32
    N = 128                                            # number of graph nodes

    key = jax.random.PRNGKey(0)
    k_re, k_im, k_x, k_ev, k_p = jax.random.split(key, 5)

    eig_re = jax.random.normal(k_re, (N, max_freqs), jnp.float32)   # EigVecs.real
    eig_im = jax.random.normal(k_im, (N, max_freqs), jnp.float32)   # EigVecs.imag
    x = jax.random.normal(k_x, (N, d_model_aggr), jnp.float32)      # batch.x
    eig_vals = jnp.abs(jax.random.normal(k_ev, (N, max_freqs), jnp.float32))
    _ = eig_vals  # TODO(synk): EigVals only drive padding/attention masks, which are
    #              config-disabled here (use_attention=False); inputs assumed dense.

    params = init_params(k_p, d_model_elem=d_model_elem,
                         d_model_aggr=d_model_aggr,
                         max_freqs=max_freqs, dim_emb=dim_emb)

    out = maglap_forward(eig_re, eig_im, x, params, tile_n=512)
    out = jax.block_until_ready(out)

    ref = maglap_reference(eig_re, eig_im, x, params)
    assert out.shape == (N, dim_emb - d_model_aggr)
    err = jnp.max(jnp.abs(out - ref))
    assert jnp.allclose(out, ref, atol=1e-3, rtol=1e-3), f"max abs err {err}"

    print("KERNEL_OK")
</pallas_src>

<mosaic_0001>
module attributes {stable_mosaic.version = 11 : i64} {
  func.func @maglap_kernel(%arg0: i32, %arg1: memref<128x32xbf16, #tpu.memory_space<vmem>>, %arg2: memref<448x128xbf16, #tpu.memory_space<vmem>>, %arg3: memref<8x128xf32, #tpu.memory_space<vmem>>, %arg4: memref<128x16xf32, #tpu.memory_space<vmem>>) attributes {dimension_semantics = [#tpu.dimension_semantics<parallel>], iteration_bounds = array<i64: 1>, scalar_prefetch = 0 : i64, scratch_operands = 0 : i64, tpu.core_type = #tpu.core_type<tc>, window_params = [{transform_indices = @transform_0, window_bounds = array<i64: 128, 32>}, {pipeline_mode = #tpu.pipeline_mode<synchronous>, transform_indices = @transform_1, window_bounds = array<i64: 448, 128>}, {pipeline_mode = #tpu.pipeline_mode<synchronous>, transform_indices = @transform_2, window_bounds = array<i64: 8, 128>}, {transform_indices = @transform_3, window_bounds = array<i64: 128, 16>}]} {
    %c0 = arith.constant 0 : index
    %c0_0 = arith.constant 0 : index
    %0 = vector.load %arg1[%c0, %c0_0] : memref<128x32xbf16, #tpu.memory_space<vmem>>, vector<128x32xbf16>
    %c0_1 = arith.constant 0 : index
    %c0_2 = arith.constant 0 : index
    %1 = vector.load %arg2[%c0_1, %c0_2] : memref<448x128xbf16, #tpu.memory_space<vmem>>, vector<32x128xbf16>
    %c32 = arith.constant 32 : index
    %c0_3 = arith.constant 0 : index
    %2 = vector.load %arg2[%c32, %c0_3] : memref<448x128xbf16, #tpu.memory_space<vmem>>, vector<128x128xbf16>
    %c160 = arith.constant 160 : index
    %c0_4 = arith.constant 0 : index
    %3 = vector.load %arg2[%c160, %c0_4] : memref<448x128xbf16, #tpu.memory_space<vmem>>, vector<128x128xbf16>
    %c288 = arith.constant 288 : index
    %c0_5 = arith.constant 0 : index
    %4 = vector.load %arg2[%c288, %c0_5] : memref<448x128xbf16, #tpu.memory_space<vmem>>, vector<128x128xbf16>
    %c416 = arith.constant 416 : index
    %c0_6 = arith.constant 0 : index
    %5 = vector.load %arg2[%c416, %c0_6] : memref<448x128xbf16, #tpu.memory_space<vmem>>, vector<32x128xbf16>
    %c0_7 = arith.constant 0 : index
    %c0_8 = arith.constant 0 : index
    %6 = vector.load %arg3[%c0_7, %c0_8] : memref<8x128xf32, #tpu.memory_space<vmem>>, vector<1x128xf32>
    %c1 = arith.constant 1 : index
    %c0_9 = arith.constant 0 : index
    %7 = vector.load %arg3[%c1, %c0_9] : memref<8x128xf32, #tpu.memory_space<vmem>>, vector<1x128xf32>
    %c2 = arith.constant 2 : index
    %c0_10 = arith.constant 0 : index
    %8 = vector.load %arg3[%c2, %c0_10] : memref<8x128xf32, #tpu.memory_space<vmem>>, vector<1x128xf32>
    %c3 = arith.constant 3 : index
    %c0_11 = arith.constant 0 : index
    %9 = vector.load %arg3[%c3, %c0_11] : memref<8x128xf32, #tpu.memory_space<vmem>>, vector<1x128xf32>
    %c4 = arith.constant 4 : index
    %c0_12 = arith.constant 0 : index
    %10 = vector.load %arg3[%c4, %c0_12] : memref<8x128xf32, #tpu.memory_space<vmem>>, vector<1x128xf32>
    %cst = arith.constant dense<0.000000e+00> : vector<128x128xf32>
    %11 = tpu.matmul %0, %1, %cst {dimension_numbers = #tpu.dot_dimension_numbers<[1], [0], [0], [1], [0, 0, 1, 1], [], []>} : vector<128x32xbf16>, vector<32x128xbf16>, vector<128x128xf32> -> vector<128x128xf32>
    %12 = vector.broadcast %6 : vector<1x128xf32> to vector<128x128xf32>
    %13 = arith.addf %11, %12 : vector<128x128xf32>
    %cst_13 = arith.constant 0.000000e+00 : f32
    %14 = vector.broadcast %cst_13 : f32 to vector<128x128xf32>
    %15 = arith.maximumf %13, %14 : vector<128x128xf32>
    %16 = arith.truncf %15 : vector<128x128xf32> to vector<128x128xbf16>
    %cst_14 = arith.constant dense<0.000000e+00> : vector<128x128xf32>
    %17 = tpu.matmul %16, %2, %cst_14 {dimension_numbers = #tpu.dot_dimension_numbers<[1], [0], [0], [1], [0, 0, 1, 1], [], []>} : vector<128x128xbf16>, vector<128x128xbf16>, vector<128x128xf32> -> vector<128x128xf32>
    %18 = vector.broadcast %7 : vector<1x128xf32> to vector<128x128xf32>
    %19 = arith.addf %17, %18 : vector<128x128xf32>
    %cst_15 = arith.constant 0.000000e+00 : f32
    %20 = vector.broadcast %cst_15 : f32 to vector<128x128xf32>
    %21 = arith.maximumf %19, %20 : vector<128x128xf32>
    %22 = vector.broadcast %6 : vector<1x128xf32> to vector<128x128xf32>
    %23 = arith.subf %22, %11 : vector<128x128xf32>
    %cst_16 = arith.constant 0.000000e+00 : f32
    %24 = vector.broadcast %cst_16 : f32 to vector<128x128xf32>
    %25 = arith.maximumf %23, %24 : vector<128x128xf32>
    %26 = arith.truncf %25 : vector<128x128xf32> to vector<128x128xbf16>
    %cst_17 = arith.constant dense<0.000000e+00> : vector<128x128xf32>
    %27 = tpu.matmul %26, %2, %cst_17 {dimension_numbers = #tpu.dot_dimension_numbers<[1], [0], [0], [1], [0, 0, 1, 1], [], []>} : vector<128x128xbf16>, vector<128x128xbf16>, vector<128x128xf32> -> vector<128x128xf32>
    %28 = vector.broadcast %7 : vector<1x128xf32> to vector<128x128xf32>
    %29 = arith.addf %27, %28 : vector<128x128xf32>
    %cst_18 = arith.constant 0.000000e+00 : f32
    %30 = vector.broadcast %cst_18 : f32 to vector<128x128xf32>
    %31 = arith.maximumf %29, %30 : vector<128x128xf32>
    %32 = arith.addf %21, %31 : vector<128x128xf32>
    %33 = arith.truncf %32 : vector<128x128xf32> to vector<128x128xbf16>
    %cst_19 = arith.constant dense<0.000000e+00> : vector<128x128xf32>
    %34 = tpu.matmul %33, %3, %cst_19 {dimension_numbers = #tpu.dot_dimension_numbers<[1], [0], [0], [1], [0, 0, 1, 1], [], []>} : vector<128x128xbf16>, vector<128x128xbf16>, vector<128x128xf32> -> vector<128x128xf32>
    %35 = vector.broadcast %8 : vector<1x128xf32> to vector<128x128xf32>
    %36 = arith.addf %34, %35 : vector<128x128xf32>
    %cst_20 = arith.constant 0.000000e+00 : f32
    %37 = vector.broadcast %cst_20 : f32 to vector<128x128xf32>
    %38 = arith.maximumf %36, %37 : vector<128x128xf32>
    %39 = arith.truncf %38 : vector<128x128xf32> to vector<128x128xbf16>
    %cst_21 = arith.constant dense<0.000000e+00> : vector<128x128xf32>
    %40 = tpu.matmul %39, %4, %cst_21 {dimension_numbers = #tpu.dot_dimension_numbers<[1], [0], [0], [1], [0, 0, 1, 1], [], []>} : vector<128x128xbf16>, vector<128x128xbf16>, vector<128x128xf32> -> vector<128x128xf32>
    %41 = vector.broadcast %9 : vector<1x128xf32> to vector<128x128xf32>
    %42 = arith.addf %40, %41 : vector<128x128xf32>
    %cst_22 = arith.constant 0.000000e+00 : f32
    %43 = vector.broadcast %cst_22 : f32 to vector<128x128xf32>
    %44 = arith.maximumf %42, %43 : vector<128x128xf32>
    %cst_23 = arith.constant dense<0.000000e+00> : vector<128x128xf32>
    %45 = tpu.matmul %0, %5, %cst_23 {dimension_numbers = #tpu.dot_dimension_numbers<[1], [0], [0], [1], [0, 0, 1, 1], [], []>} : vector<128x32xbf16>, vector<32x128xbf16>, vector<128x128xf32> -> vector<128x128xf32>
    %46 = vector.broadcast %10 : vector<1x128xf32> to vector<128x128xf32>
    %47 = arith.addf %45, %46 : vector<128x128xf32>
    %48 = arith.addf %47, %44 : vector<128x128xf32>
    %49 = vector.extract_strided_slice %48 {offsets = [0, 0], sizes = [128, 16], strides = [1, 1]} : vector<128x128xf32> to vector<128x16xf32>
    %c0_24 = arith.constant 0 : index
    %c0_25 = arith.constant 0 : index
    %50 = vector.load %arg4[%c0_24, %c0_25] : memref<128x16xf32, #tpu.memory_space<vmem>>, vector<128x16xf32>
    tpu.vector_store %arg4[%c0_24, %c0_25], %49 {strides = array<i32>} : memref<128x16xf32, #tpu.memory_space<vmem>>, vector<128x16xf32>,
    return
  }
  func.func @transform_0(%arg0: i32) -> (i32, i32) {
    %c0_i32 = arith.constant 0 : i32
    %c0_i32_0 = arith.constant 0 : i32
    return %arg0, %c0_i32 : i32, i32
  }
  func.func @transform_1(%arg0: i32) -> (i32, i32) {
    %c0_i32 = arith.constant 0 : i32
    %c0_i32_0 = arith.constant 0 : i32
    %c0_i32_1 = arith.constant 0 : i32
    return %c0_i32, %c0_i32_0 : i32, i32
  }
  func.func @transform_2(%arg0: i32) -> (i32, i32) {
    %c0_i32 = arith.constant 0 : i32
    %c0_i32_0 = arith.constant 0 : i32
    %c0_i32_1 = arith.constant 0 : i32
    return %c0_i32, %c0_i32_0 : i32, i32
  }
  func.func @transform_3(%arg0: i32) -> (i32, i32) {
    %c0_i32 = arith.constant 0 : i32
    %c0_i32_0 = arith.constant 0 : i32
    return %arg0, %c0_i32 : i32, i32
  }
}

</mosaic_0001>

<llo_original>
// kernel: tpu_custom_call.1
$region0: #{tpu_custom_call.1}
  #allocation0 [shape = 'u32[]', space=smem, size = 0x4, offset = 0x4, fixed_abs, tag = 'smem constant byte address 0x4 - core index']
  #allocation1 [shape = 'u32[72,128]{1,0:T(1,128)}', space=vmem, size = 0x9000, scoped, tag = 'internal scratch']
  %s0 = inlined_call_operand.vmem [shape: bf16[128,32], index: 0, kind: input, shape index: {}]
  %s1 = inlined_call_operand.hbm [shape: bf16[448,128], index: 1, kind: input, shape index: {}]
  %s2 = inlined_call_operand.vmem [shape: f32[8,128], index: 2, kind: input, shape index: {}]
  %s3 = inlined_call_operand.vmem [shape: f32[128,16], index: 3, kind: output, shape index: {}]
  %s4 = sld [smem:[#allocation0]]
  $region26: #{tpu_custom_call.1} parent=0
    _
  %s6 = ssub.s32 1, %s4
  %s7 = scalar_select 0, %s6, %s4
  $region1: #{tpu_custom_call.1} parent=0
    #allocation2 [shape = 'u8[114688]{0}', space=vmem, size = 0x1c000, scoped, tag = 'input window, operand 1, single buffered']
    #allocation3 [shape = 's32[1]{0}', space=sflag, size = 0x4, scoped, tag = 'scoped memory for tpu_custom_call.1']
    %8 = vsyncpa [#allocation3], 0
    // Predicated region
    $region2: #{tpu_custom_call.1} parent=1 // pred_check
      _
    $region3: #{tpu_custom_call.1} parent=1 // pred_check_branch
      %10 = sbr.rel (0) target = $region5
    $region4: #{tpu_custom_call.1} parent=1 // pred_region
      _
    $region5: #{tpu_custom_call.1} parent=1 // pred_fallthru
      _
    // Predicated region
    $region6: #{tpu_custom_call.1} parent=1 // pred_check
      _
    $region7: #{tpu_custom_call.1} parent=1 // pred_check_branch
      %12 = sbr.rel (0) target = $region9
    $region8: #{tpu_custom_call.1} parent=1 // pred_region
      %14 = vsyncadd [#allocation3], 0
      %s15 = sshll.u32 %s1, 4
      %s16 = int_to_ptr.hbm [resolvable:$true] %s15
      %s17 = sshll.u32 [#allocation2], 4
      %s18 = int_to_ptr.vmem [resolvable:$true] %s17
      %23 = dma.hbm_to_vmem [thread:$0]  %s16, 3584, %s18, [#allocation3], 64, 64, 4
    $region9: #{tpu_custom_call.1} parent=1 // pred_fallthru
      _
    // Predicated region
    $region10: #{tpu_custom_call.1} parent=1 // pred_check
      _
    $region11: #{tpu_custom_call.1} parent=1 // pred_check_branch
      %25 = sbr.rel (0) target = $region13
    $region12: #{tpu_custom_call.1} parent=1 // pred_region
      _
    $region13: #{tpu_custom_call.1} parent=1 // pred_fallthru
      _
    // Predicated region
    $region14: #{tpu_custom_call.1} parent=1 // pred_check
      _
    $region15: #{tpu_custom_call.1} parent=1 // pred_check_branch
      %27 = sbr.rel (0) target = $region17
    $region16: #{tpu_custom_call.1} parent=1 // pred_region
      %29 = dma.done [#allocation3], 3584
    $region17: #{tpu_custom_call.1} parent=1 // pred_fallthru
      _
    %v31 = vld [vmem:[%s0] sm:$0xf]
    %v32 = vld [vmem:[%s0 + $0x4] sm:$0xf]
    %v33 = vld [vmem:[%s0 + $0x8] sm:$0xf]
    %v34 = vld [vmem:[%s0 + $0xc] sm:$0xf]
    %v35 = vld [vmem:[%s0 + $0x10] sm:$0xf]
    %v36 = vld [vmem:[%s0 + $0x14] sm:$0xf]
    %v37 = vld [vmem:[%s0 + $0x18] sm:$0xf]
    %v38 = vld [vmem:[%s0 + $0x1c] sm:$0xf]
    %v39 = vld [vmem:[%s0 + $0x20] sm:$0xf]
    %v40 = vld [vmem:[%s0 + $0x24] sm:$0xf]
    %v41 = vld [vmem:[%s0 + $0x28] sm:$0xf]
    %v42 = vld [vmem:[%s0 + $0x2c] sm:$0xf]
    %v43 = vld [vmem:[%s0 + $0x30] sm:$0xf]
    %v44 = vld [vmem:[%s0 + $0x34] sm:$0xf]
    %v45 = vld [vmem:[%s0 + $0x38] sm:$0xf]
    %v46 = vld [vmem:[%s0 + $0x3c] sm:$0xf]
    %v47 = vld [vmem:[#allocation2] sm:$0xf]
    %v48 = vld [vmem:[#allocation2 + $0x4] sm:$0xf]
    %v49 = vld [vmem:[#allocation2 + $0x8] sm:$0xf]
    %v50 = vld [vmem:[#allocation2 + $0xc] sm:$0xf]
    %v51 = vld [vmem:[#allocation2 + $0x10] sm:$0xf]
    %v52 = vld [vmem:[#allocation2 + $0x14] sm:$0xf]
    %v53 = vld [vmem:[#allocation2 + $0x18] sm:$0xf]
    %v54 = vld [vmem:[#allocation2 + $0x1c] sm:$0xf]
    %v55 = vld [vmem:[#allocation2 + $0x20] sm:$0xf]
    %v56 = vld [vmem:[#allocation2 + $0x24] sm:$0xf]
    %v57 = vld [vmem:[#allocation2 + $0x28] sm:$0xf]
    %v58 = vld [vmem:[#allocation2 + $0x2c] sm:$0xf]
    %v59 = vld [vmem:[#allocation2 + $0x30] sm:$0xf]
    %v60 = vld [vmem:[#allocation2 + $0x34] sm:$0xf]
    %v61 = vld [vmem:[#allocation2 + $0x38] sm:$0xf]
    %v62 = vld [vmem:[#allocation2 + $0x3c] sm:$0xf]
    %v63 = vld [vmem:[#allocation2 + $0x40] sm:$0xf]
    %v64 = vld [vmem:[#allocation2 + $0x44] sm:$0xf]
    %v65 = vld [vmem:[#allocation2 + $0x48] sm:$0xf]
    %v66 = vld [vmem:[#allocation2 + $0x4c] sm:$0xf]
    %v67 = vld [vmem:[#allocation2 + $0x50] sm:$0xf]
    %v68 = vld [vmem:[#allocation2 + $0x54] sm:$0xf]
    %v69 = vld [vmem:[#allocation2 + $0x58] sm:$0xf]
    %v70 = vld [vmem:[#allocation2 + $0x5c] sm:$0xf]
    %v71 = vld [vmem:[#allocation2 + $0x60] sm:$0xf]
    %v72 = vld [vmem:[#allocation2 + $0x64] sm:$0xf]
    %v73 = vld [vmem:[#allocation2 + $0x68] sm:$0xf]
    %v74 = vld [vmem:[#allocation2 + $0x6c] sm:$0xf]
    %v75 = vld [vmem:[#allocation2 + $0x70] sm:$0xf]
    %v76 = vld [vmem:[#allocation2 + $0x74] sm:$0xf]
    %v77 = vld [vmem:[#allocation2 + $0x78] sm:$0xf]
    %v78 = vld [vmem:[#allocation2 + $0x7c] sm:$0xf]
    %v79 = vld [vmem:[#allocation2 + $0x80] sm:$0xf]
    %v80 = vld [vmem:[#allocation2 + $0x84] sm:$0xf]
    %v81 = vld [vmem:[#allocation2 + $0x88] sm:$0xf]
    %v82 = vld [vmem:[#allocation2 + $0x8c] sm:$0xf]
    %v83 = vld [vmem:[#allocation2 + $0x90] sm:$0xf]
    %v84 = vld [vmem:[#allocation2 + $0x94] sm:$0xf]
    %v85 = vld [vmem:[#allocation2 + $0x98] sm:$0xf]
    %v86 = vld [vmem:[#allocation2 + $0x9c] sm:$0xf]
    %v87 = vld [vmem:[#allocation2 + $0xa0] sm:$0xf]
    %v88 = vld [vmem:[#allocation2 + $0xa4] sm:$0xf]
    %v89 = vld [vmem:[#allocation2 + $0xa8] sm:$0xf]
    %v90 = vld [vmem:[#allocation2 + $0xac] sm:$0xf]
    %v91 = vld [vmem:[#allocation2 + $0xb0] sm:$0xf]
    %v92 = vld [vmem:[#allocation2 + $0xb4] sm:$0xf]
    %v93 = vld [vmem:[#allocation2 + $0xb8] sm:$0xf]
    %v94 = vld [vmem:[#allocation2 + $0xbc] sm:$0xf]
    %v95 = vld [vmem:[#allocation2 + $0xc0] sm:$0xf]
    %v96 = vld [vmem:[#allocation2 + $0xc4] sm:$0xf]
    %v97 = vld [vmem:[#allocation2 + $0xc8] sm:$0xf]
    %v98 = vld [vmem:[#allocation2 + $0xcc] sm:$0xf]
    %v99 = vld [vmem:[#allocation2 + $0xd0] sm:$0xf]
    %v100 = vld [vmem:[#allocation2 + $0xd4] sm:$0xf]
    %v101 = vld [vmem:[#allocation2 + $0xd8] sm:$0xf]
    %v102 = vld [vmem:[#allocation2 + $0xdc] sm:$0xf]
    %v103 = vld [vmem:[%s2] sm:$0x1]
    %v104 = vld [vmem:[%s2 + $0x1] sm:$0x1]
    %v105 = vld [vmem:[%s2 + $0x2] sm:$0x1]
    %v106 = vld [vmem:[%s2 + $0x3] sm:$0x1]
    %v107 = vld [vmem:[%s2 + $0x4] sm:$0x1]
    %v124 = vunpack.c.l.b16 %v31
    %v125 = vunpack.c.l.b16 %v32
    %v126 = vunpack.c.l.b16 %v33
    %v127 = vunpack.c.l.b16 %v34
    %v128 = vunpack.c.l.b16 %v35
    %v129 = vunpack.c.l.b16 %v36
    %v130 = vunpack.c.l.b16 %v37
    %v131 = vunpack.c.l.b16 %v38
    %v132 = vunpack.c.l.b16 %v39
    %v133 = vunpack.c.l.b16 %v40
    %v134 = vunpack.c.l.b16 %v41
    %v135 = vunpack.c.l.b16 %v42
    %v136 = vunpack.c.l.b16 %v43
    %v137 = vunpack.c.l.b16 %v44
    %v138 = vunpack.c.l.b16 %v45
    %v139 = vunpack.c.l.b16 %v46
    %v140 = vpack.c.b16 %v125, %v124
    %v141 = vpack.c.b16 %v127, %v126
    %v142 = vpack.c.b16 %v129, %v128
    %v143 = vpack.c.b16 %v131, %v130
    %v144 = vpack.c.b16 %v133, %v132
    %v145 = vpack.c.b16 %v135, %v134
    %v146 = vpack.c.b16 %v137, %v136
    %v147 = vpack.c.b16 %v139, %v138
    %v152 = vunpack.c.l.b16 %v47
    %v153 = vunpack.c.l.b16 %v48
    %v154 = vunpack.c.l.b16 %v49
    %v155 = vunpack.c.l.b16 %v50
    %v156 = vpack.c.b16 %v153, %v152
    %v157 = vpack.c.b16 %v155, %v154
    %vm160 = vcmask 261120
    %v162 = vsel %vm160, %v140, 0
    %v165 = vsel %vm160, %v141, 0
    %v168 = vsel %vm160, %v142, 0
    %v171 = vsel %vm160, %v143, 0
    %v174 = vsel %vm160, %v144, 0
    %v177 = vsel %vm160, %v145, 0
    %v180 = vsel %vm160, %v146, 0
    %v183 = vsel %vm160, %v147, 0
    %185 = vmatpush.bf16.msra.mxu0 0
    %186 = vmatpush.bf16.msra.mxu0 0
    %187 = vmatpush.bf16.msra.mxu0 0
    %188 = vmatpush.bf16.msra.mxu0 0
    %189 = vmatpush.bf16.msra.mxu0 0
    %190 = vmatpush.bf16.msra.mxu0 0
    %191 = vmatpush.bf16.msra.mxu0 %v157
    %192 = vmatpush.bf16.msra.mxu0 %v156
    %193 = vmatmul.bf16.gmra.mxu0 %v162
    %v194 = vpop.f32.mrf.mxu0
    %v195 = vadd.f32 0.0, %v194
    %v196 = vpop.f32.mrf.mxu0
    %v197 = vadd.f32 0.0, %v196
    %198 = vmatmul.bf16.gmra.mxu0 %v165
    %v199 = vpop.f32.mrf.mxu0
    %v200 = vadd.f32 0.0, %v199
    %v201 = vpop.f32.mrf.mxu0
    %v202 = vadd.f32 0.0, %v201
    %203 = vmatmul.bf16.gmra.mxu0 %v168
    %v204 = vpop.f32.mrf.mxu0
    %v205 = vadd.f32 0.0, %v204
    %v206 = vpop.f32.mrf.mxu0
    %v207 = vadd.f32 0.0, %v206
    %208 = vmatmul.bf16.gmra.mxu0 %v171
    %v209 = vpop.f32.mrf.mxu0
    %v210 = vadd.f32 0.0, %v209
    %v211 = vpop.f32.mrf.mxu0
    %v212 = vadd.f32 0.0, %v211
    %213 = vmatmul.bf16.gmra.mxu0 %v174
    %v214 = vpop.f32.mrf.mxu0
    %v215 = vadd.f32 0.0, %v214
    %v216 = vpop.f32.mrf.mxu0
    %v217 = vadd.f32 0.0, %v216
    %218 = vmatmul.bf16.gmra.mxu0 %v177
    %v219 = vpop.f32.mrf.mxu0
    %v220 = vadd.f32 0.0, %v219
    %v221 = vpop.f32.mrf.mxu0
    %v222 = vadd.f32 0.0, %v221
    %223 = vmatmul.bf16.gmra.mxu0 %v180
    %v224 = vpop.f32.mrf.mxu0
    %v225 = vadd.f32 0.0, %v224
    %v226 = vpop.f32.mrf.mxu0
    %v227 = vadd.f32 0.0, %v226
    %228 = vmatmul.bf16.gmra.mxu0 %v183
    %v229 = vpop.f32.mrf.mxu0
    %v230 = vadd.f32 0.0, %v229
    %v231 = vpop.f32.mrf.mxu0
    %v232 = vadd.f32 0.0, %v231
    %233 = vdwg.mxu0
    %v234 = vperm.slane %v103, 0
    %v235 = vadd.f32 %v195, %v234
    %v236 = vadd.f32 %v197, %v234
    %v237 = vadd.f32 %v200, %v234
    %v238 = vadd.f32 %v202, %v234
    %v239 = vadd.f32 %v205, %v234
    %v240 = vadd.f32 %v207, %v234
    %v241 = vadd.f32 %v210, %v234
    %v242 = vadd.f32 %v212, %v234
    %v243 = vadd.f32 %v215, %v234
    %v244 = vadd.f32 %v217, %v234
    %v245 = vadd.f32 %v220, %v234
    %v246 = vadd.f32 %v222, %v234
    %v247 = vadd.f32 %v225, %v234
    %v248 = vadd.f32 %v227, %v234
    %v249 = vadd.f32 %v230, %v234
    %v250 = vadd.f32 %v232, %v234
    %v251 = vmax.f32 %v235, 0.0
    %v252 = vmax.f32 %v236, 0.0
    %v253 = vmax.f32 %v237, 0.0
    %v254 = vmax.f32 %v238, 0.0
    %v255 = vmax.f32 %v239, 0.0
    %v256 = vmax.f32 %v240, 0.0
    %v257 = vmax.f32 %v241, 0.0
    %v258 = vmax.f32 %v242, 0.0
    %v259 = vmax.f32 %v243, 0.0
    %v260 = vmax.f32 %v244, 0.0
    %v261 = vmax.f32 %v245, 0.0
    %v262 = vmax.f32 %v246, 0.0
    %v263 = vmax.f32 %v247, 0.0
    %v264 = vmax.f32 %v248, 0.0
    %v265 = vmax.f32 %v249, 0.0
    %v266 = vmax.f32 %v250, 0.0
    %v267 = vpack.c.bf16 %v252, %v251
    %v268 = vpack.c.bf16 %v254, %v253
    %v269 = vpack.c.bf16 %v256, %v255
    %v270 = vpack.c.bf16 %v258, %v257
    %v271 = vpack.c.bf16 %v260, %v259
    %v272 = vpack.c.bf16 %v262, %v261
    %v273 = vpack.c.bf16 %v264, %v263
    %v274 = vpack.c.bf16 %v266, %v265
    %v275 = vperm.slane %v104, 0
    %v292 = vunpack.c.l.b16 %v51
    %v293 = vunpack.c.l.b16 %v52
    %v294 = vunpack.c.l.b16 %v53
    %v295 = vunpack.c.l.b16 %v54
    %v296 = vunpack.c.l.b16 %v55
    %v297 = vunpack.c.l.b16 %v56
    %v298 = vunpack.c.l.b16 %v57
    %v299 = vunpack.c.l.b16 %v58
    %v300 = vunpack.c.l.b16 %v59
    %v301 = vunpack.c.l.b16 %v60
    %v302 = vunpack.c.l.b16 %v61
    %v303 = vunpack.c.l.b16 %v62
    %v304 = vunpack.c.l.b16 %v63
    %v305 = vunpack.c.l.b16 %v64
    %v306 = vunpack.c.l.b16 %v65
    %v307 = vunpack.c.l.b16 %v66
    %v308 = vpack.c.b16 %v293, %v292
    %v309 = vpack.c.b16 %v295, %v294
    %v310 = vpack.c.b16 %v297, %v296
    %v311 = vpack.c.b16 %v299, %v298
    %v312 = vpack.c.b16 %v301, %v300
    %v313 = vpack.c.b16 %v303, %v302
    %v314 = vpack.c.b16 %v305, %v304
    %v315 = vpack.c.b16 %v307, %v306
    %324 = vmatpush.bf16.msra.mxu0 %v315
    %325 = vmatpush.bf16.msra.mxu0 %v314
    %326 = vmatpush.bf16.msra.mxu0 %v313
    %327 = vmatpush.bf16.msra.mxu0 %v312
    %328 = vmatpush.bf16.msra.mxu0 %v311
    %329 = vmatpush.bf16.msra.mxu0 %v310
    %330 = vmatpush.bf16.msra.mxu0 %v309
    %331 = vmatpush.bf16.msra.mxu0 %v308
    %332 = vmatmul.bf16.gmra.mxu0 %v267
    %v333 = vpop.f32.mrf.mxu0
    %v334 = vadd.f32 %v275, %v333
    %v335 = vpop.f32.mrf.mxu0
    %v336 = vadd.f32 %v275, %v335
    %337 = vmatmul.bf16.gmra.mxu0 %v268
    %v338 = vpop.f32.mrf.mxu0
    %v339 = vadd.f32 %v275, %v338
    %v340 = vpop.f32.mrf.mxu0
    %v341 = vadd.f32 %v275, %v340
    %342 = vmatmul.bf16.gmra.mxu0 %v269
    %v343 = vpop.f32.mrf.mxu0
    %v344 = vadd.f32 %v275, %v343
    %v345 = vpop.f32.mrf.mxu0
    %v346 = vadd.f32 %v275, %v345
    %347 = vmatmul.bf16.gmra.mxu0 %v270
    %v348 = vpop.f32.mrf.mxu0
    %v349 = vadd.f32 %v275, %v348
    %v350 = vpop.f32.mrf.mxu0
    %v351 = vadd.f32 %v275, %v350
    %352 = vmatmul.bf16.gmra.mxu0 %v271
    %v353 = vpop.f32.mrf.mxu0
    %v354 = vadd.f32 %v275, %v353
    %v355 = vpop.f32.mrf.mxu0
    %v356 = vadd.f32 %v275, %v355
    %357 = vmatmul.bf16.gmra.mxu0 %v272
    %v358 = vpop.f32.mrf.mxu0
    %v359 = vadd.f32 %v275, %v358
    %v360 = vpop.f32.mrf.mxu0
    %v361 = vadd.f32 %v275, %v360
    %362 = vmatmul.bf16.gmra.mxu0 %v273
    %v363 = vpop.f32.mrf.mxu0
    %v364 = vadd.f32 %v275, %v363
    %v365 = vpop.f32.mrf.mxu0
    %v366 = vadd.f32 %v275, %v365
    %367 = vmatmul.bf16.gmra.mxu0 %v274
    %v368 = vpop.f32.mrf.mxu0
    %v369 = vadd.f32 %v275, %v368
    %v370 = vpop.f32.mrf.mxu0
    %v371 = vadd.f32 %v275, %v370
    %372 = vdwg.mxu0
    %v373 = vmax.f32 %v334, 0.0
    %v374 = vmax.f32 %v336, 0.0
    %v375 = vmax.f32 %v339, 0.0
    %v376 = vmax.f32 %v341, 0.0
    %v377 = vmax.f32 %v344, 0.0
    %v378 = vmax.f32 %v346, 0.0
    %v379 = vmax.f32 %v349, 0.0
    %v380 = vmax.f32 %v351, 0.0
    %v381 = vmax.f32 %v354, 0.0
    %v382 = vmax.f32 %v356, 0.0
    %v383 = vmax.f32 %v359, 0.0
    %v384 = vmax.f32 %v361, 0.0
    %v385 = vmax.f32 %v364, 0.0
    %v386 = vmax.f32 %v366, 0.0
    %v387 = vmax.f32 %v369, 0.0
    %v388 = vmax.f32 %v371, 0.0
    %v389 = vsub.f32 %v234, %v195
    %v390 = vsub.f32 %v234, %v197
    %v391 = vsub.f32 %v234, %v200
    %v392 = vsub.f32 %v234, %v202
    %v393 = vsub.f32 %v234, %v205
    %v394 = vsub.f32 %v234, %v207
    %v395 = vsub.f32 %v234, %v210
    %v396 = vsub.f32 %v234, %v212
    %v397 = vsub.f32 %v234, %v215
    %v398 = vsub.f32 %v234, %v217
    %v399 = vsub.f32 %v234, %v220
    %v400 = vsub.f32 %v234, %v222
    %v401 = vsub.f32 %v234, %v225
    %v402 = vsub.f32 %v234, %v227
    %v403 = vsub.f32 %v234, %v230
    %v404 = vsub.f32 %v234, %v232
    %v405 = vmax.f32 %v389, 0.0
    %v406 = vmax.f32 %v390, 0.0
    %v407 = vmax.f32 %v391, 0.0
    %v408 = vmax.f32 %v392, 0.0
    %v409 = vmax.f32 %v393, 0.0
    %v410 = vmax.f32 %v394, 0.0
    %v411 = vmax.f32 %v395, 0.0
    %v412 = vmax.f32 %v396, 0.0
    %v413 = vmax.f32 %v397, 0.0
    %v414 = vmax.f32 %v398, 0.0
    %v415 = vmax.f32 %v399, 0.0
    %v416 = vmax.f32 %v400, 0.0
    %v417 = vmax.f32 %v401, 0.0
    %v418 = vmax.f32 %v402, 0.0
    %v419 = vmax.f32 %v403, 0.0
    %v420 = vmax.f32 %v404, 0.0
    %v421 = vpack.c.bf16 %v406, %v405
    %v422 = vpack.c.bf16 %v408, %v407
    %v423 = vpack.c.bf16 %v410, %v409
    %v424 = vpack.c.bf16 %v412, %v411
    %v425 = vpack.c.bf16 %v414, %v413
    %v426 = vpack.c.bf16 %v416, %v415
    %v427 = vpack.c.bf16 %v418, %v417
    %v428 = vpack.c.bf16 %v420, %v419
    %429 = vmatpush.bf16.msra.mxu0 %v315
    %430 = vmatpush.bf16.msra.mxu0 %v314
    %431 = vmatpush.bf16.msra.mxu0 %v313
    %432 = vmatpush.bf16.msra.mxu0 %v312
    %433 = vmatpush.bf16.msra.mxu0 %v311
    %434 = vmatpush.bf16.msra.mxu0 %v310
    %435 = vmatpush.bf16.msra.mxu0 %v309
    %436 = vmatpush.bf16.msra.mxu0 %v308
    %437 = vmatmul.bf16.gmra.mxu0 %v421
    %v438 = vpop.f32.mrf.mxu0
    %v439 = vadd.f32 %v275, %v438
    %v440 = vpop.f32.mrf.mxu0
    %v441 = vadd.f32 %v275, %v440
    %442 = vmatmul.bf16.gmra.mxu0 %v422
    %v443 = vpop.f32.mrf.mxu0
    %v444 = vadd.f32 %v275, %v443
    %v445 = vpop.f32.mrf.mxu0
    %v446 = vadd.f32 %v275, %v445
    %447 = vmatmul.bf16.gmra.mxu0 %v423
    %v448 = vpop.f32.mrf.mxu0
    %v449 = vadd.f32 %v275, %v448
    %v450 = vpop.f32.mrf.mxu0
    %v451 = vadd.f32 %v275, %v450
    %452 = vmatmul.bf16.gmra.mxu0 %v424
    %v453 = vpop.f32.mrf.mxu0
    %v454 = vadd.f32 %v275, %v453
    %v455 = vpop.f32.mrf.mxu0
    %v456 = vadd.f32 %v275, %v455
    %457 = vmatmul.bf16.gmra.mxu0 %v425
    %v458 = vpop.f32.mrf.mxu0
    %v459 = vadd.f32 %v275, %v458
    %v460 = vpop.f32.mrf.mxu0
    %v461 = vadd.f32 %v275, %v460
    %462 = vmatmul.bf16.gmra.mxu0 %v426
    %v463 = vpop.f32.mrf.mxu0
    %v464 = vadd.f32 %v275, %v463
    %v465 = vpop.f32.mrf.mxu0
    %v466 = vadd.f32 %v275, %v465
    %467 = vmatmul.bf16.gmra.mxu0 %v427
    %v468 = vpop.f32.mrf.mxu0
    %v469 = vadd.f32 %v275, %v468
    %v470 = vpop.f32.mrf.mxu0
    %v471 = vadd.f32 %v275, %v470
    %472 = vmatmul.bf16.gmra.mxu0 %v428
    %v473 = vpop.f32.mrf.mxu0
    %v474 = vadd.f32 %v275, %v473
    %v475 = vpop.f32.mrf.mxu0
    %v476 = vadd.f32 %v275, %v475
    %477 = vdwg.mxu0
    %v478 = vmax.f32 %v439, 0.0
    %v479 = vmax.f32 %v441, 0.0
    %v480 = vmax.f32 %v444, 0.0
    %v481 = vmax.f32 %v446, 0.0
    %v482 = vmax.f32 %v449, 0.0
    %v483 = vmax.f32 %v451, 0.0
    %v484 = vmax.f32 %v454, 0.0
    %v485 = vmax.f32 %v456, 0.0
    %v486 = vmax.f32 %v459, 0.0
    %v487 = vmax.f32 %v461, 0.0
    %v488 = vmax.f32 %v464, 0.0
    %v489 = vmax.f32 %v466, 0.0
    %v490 = vmax.f32 %v469, 0.0
    %v491 = vmax.f32 %v471, 0.0
    %v492 = vmax.f32 %v474, 0.0
    %v493 = vmax.f32 %v476, 0.0
    %v494 = vadd.f32 %v373, %v478
    %v495 = vadd.f32 %v374, %v479
    %v496 = vadd.f32 %v375, %v480
    %v497 = vadd.f32 %v376, %v481
    %v498 = vadd.f32 %v377, %v482
    %v499 = vadd.f32 %v378, %v483
    %v500 = vadd.f32 %v379, %v484
    %v501 = vadd.f32 %v380, %v485
    %v502 = vadd.f32 %v381, %v486
    %v503 = vadd.f32 %v382, %v487
    %v504 = vadd.f32 %v383, %v488
    %v505 = vadd.f32 %v384, %v489
    %v506 = vadd.f32 %v385, %v490
    %v507 = vadd.f32 %v386, %v491
    %v508 = vadd.f32 %v387, %v492
    %v509 = vadd.f32 %v388, %v493
    %v510 = vpack.c.bf16 %v495, %v494
    %v511 = vpack.c.bf16 %v497, %v496
    %v512 = vpack.c.bf16 %v499, %v498
    %v513 = vpack.c.bf16 %v501, %v500
    %v514 = vpack.c.bf16 %v503, %v502
    %v515 = vpack.c.bf16 %v505, %v504
    %v516 = vpack.c.bf16 %v507, %v506
    %v517 = vpack.c.bf16 %v509, %v508
    %v518 = vperm.slane %v105, 0
    %v535 = vunpack.c.l.b16 %v67
    %v536 = vunpack.c.l.b16 %v68
    %v537 = vunpack.c.l.b16 %v69
    %v538 = vunpack.c.l.b16 %v70
    %v539 = vunpack.c.l.b16 %v71
    %v540 = vunpack.c.l.b16 %v72
    %v541 = vunpack.c.l.b16 %v73
    %v542 = vunpack.c.l.b16 %v74
    %v543 = vunpack.c.l.b16 %v75
    %v544 = vunpack.c.l.b16 %v76
    %v545 = vunpack.c.l.b16 %v77
    %v546 = vunpack.c.l.b16 %v78
    %v547 = vunpack.c.l.b16 %v79
    %v548 = vunpack.c.l.b16 %v80
    %v549 = vunpack.c.l.b16 %v81
    %v550 = vunpack.c.l.b16 %v82
    %v551 = vpack.c.b16 %v536, %v535
    %v552 = vpack.c.b16 %v538, %v537
    %v553 = vpack.c.b16 %v540, %v539
    %v554 = vpack.c.b16 %v542, %v541
    %v555 = vpack.c.b16 %v544, %v543
    %v556 = vpack.c.b16 %v546, %v545
    %v557 = vpack.c.b16 %v548, %v547
    %v558 = vpack.c.b16 %v550, %v549
    %567 = vmatpush.bf16.msra.mxu0 %v558
    %568 = vmatpush.bf16.msra.mxu0 %v557
    %569 = vmatpush.bf16.msra.mxu0 %v556
    %570 = vmatpush.bf16.msra.mxu0 %v555
    %571 = vmatpush.bf16.msra.mxu0 %v554
    %572 = vmatpush.bf16.msra.mxu0 %v553
    %573 = vmatpush.bf16.msra.mxu0 %v552
    %574 = vmatpush.bf16.msra.mxu0 %v551
    %575 = vmatmul.bf16.gmra.mxu0 %v510
    %v576 = vpop.f32.mrf.mxu0
    %v577 = vadd.f32 %v518, %v576
    %v578 = vpop.f32.mrf.mxu0
    %v579 = vadd.f32 %v518, %v578
    %580 = vmatmul.bf16.gmra.mxu0 %v511
    %v581 = vpop.f32.mrf.mxu0
    %v582 = vadd.f32 %v518, %v581
    %v583 = vpop.f32.mrf.mxu0
    %v584 = vadd.f32 %v518, %v583
    %585 = vmatmul.bf16.gmra.mxu0 %v512
    %v586 = vpop.f32.mrf.mxu0
    %v587 = vadd.f32 %v518, %v586
    %v588 = vpop.f32.mrf.mxu0
    %v589 = vadd.f32 %v518, %v588
    %590 = vmatmul.bf16.gmra.mxu0 %v513
    %v591 = vpop.f32.mrf.mxu0
    %v592 = vadd.f32 %v518, %v591
    %v593 = vpop.f32.mrf.mxu0
    %v594 = vadd.f32 %v518, %v593
    %595 = vmatmul.bf16.gmra.mxu0 %v514
    %v596 = vpop.f32.mrf.mxu0
    %v597 = vadd.f32 %v518, %v596
    %v598 = vpop.f32.mrf.mxu0
    %v599 = vadd.f32 %v518, %v598
    %600 = vmatmul.bf16.gmra.mxu0 %v515
    %v601 = vpop.f32.mrf.mxu0
    %v602 = vadd.f32 %v518, %v601
    %v603 = vpop.f32.mrf.mxu0
    %v604 = vadd.f32 %v518, %v603
    %605 = vmatmul.bf16.gmra.mxu0 %v516
    %v606 = vpop.f32.mrf.mxu0
    %v607 = vadd.f32 %v518, %v606
    %v608 = vpop.f32.mrf.mxu0
    %v609 = vadd.f32 %v518, %v608
    %610 = vmatmul.bf16.gmra.mxu0 %v517
    %v611 = vpop.f32.mrf.mxu0
    %v612 = vadd.f32 %v518, %v611
    %v613 = vpop.f32.mrf.mxu0
    %v614 = vadd.f32 %v518, %v613
    %615 = vdwg.mxu0
    %v616 = vmax.f32 %v577, 0.0
    %v617 = vmax.f32 %v579, 0.0
    %v618 = vmax.f32 %v582, 0.0
    %v619 = vmax.f32 %v584, 0.0
    %v620 = vmax.f32 %v587, 0.0
    %v621 = vmax.f32 %v589, 0.0
    %v622 = vmax.f32 %v592, 0.0
    %v623 = vmax.f32 %v594, 0.0
    %v624 = vmax.f32 %v597, 0.0
    %v625 = vmax.f32 %v599, 0.0
    %v626 = vmax.f32 %v602, 0.0
    %v627 = vmax.f32 %v604, 0.0
    %v628 = vmax.f32 %v607, 0.0
    %v629 = vmax.f32 %v609, 0.0
    %v630 = vmax.f32 %v612, 0.0
    %v631 = vmax.f32 %v614, 0.0
    %v632 = vpack.c.bf16 %v617, %v616
    %v633 = vpack.c.bf16 %v619, %v618
    %v634 = vpack.c.bf16 %v621, %v620
    %v635 = vpack.c.bf16 %v623, %v622
    %v636 = vpack.c.bf16 %v625, %v624
    %v637 = vpack.c.bf16 %v627, %v626
    %v638 = vpack.c.bf16 %v629, %v628
    %v639 = vpack.c.bf16 %v631, %v630
    %v640 = vperm.slane %v106, 0
    %v657 = vunpack.c.l.b16 %v83
    %v658 = vunpack.c.l.b16 %v84
    %v659 = vunpack.c.l.b16 %v85
    %v660 = vunpack.c.l.b16 %v86
    %v661 = vunpack.c.l.b16 %v87
    %v662 = vunpack.c.l.b16 %v88
    %v663 = vunpack.c.l.b16 %v89
    %v664 = vunpack.c.l.b16 %v90
    %v665 = vunpack.c.l.b16 %v91
    %v666 = vunpack.c.l.b16 %v92
    %v667 = vunpack.c.l.b16 %v93
    %v668 = vunpack.c.l.b16 %v94
    %v669 = vunpack.c.l.b16 %v95
    %v670 = vunpack.c.l.b16 %v96
    %v671 = vunpack.c.l.b16 %v97
    %v672 = vunpack.c.l.b16 %v98
    %v673 = vpack.c.b16 %v658, %v657
    %v674 = vpack.c.b16 %v660, %v659
    %v675 = vpack.c.b16 %v662, %v661
    %v676 = vpack.c.b16 %v664, %v663
    %v677 = vpack.c.b16 %v666, %v665
    %v678 = vpack.c.b16 %v668, %v667
    %v679 = vpack.c.b16 %v670, %v669
    %v680 = vpack.c.b16 %v672, %v671
    %689 = vmatpush.bf16.msra.mxu0 %v680
    %690 = vmatpush.bf16.msra.mxu0 %v679
    %691 = vmatpush.bf16.msra.mxu0 %v678
    %692 = vmatpush.bf16.msra.mxu0 %v677
    %693 = vmatpush.bf16.msra.mxu0 %v676
    %694 = vmatpush.bf16.msra.mxu0 %v675
    %695 = vmatpush.bf16.msra.mxu0 %v674
    %696 = vmatpush.bf16.msra.mxu0 %v673
    %697 = vmatmul.bf16.gmra.mxu0 %v632
    %v698 = vpop.f32.mrf.mxu0
    %v699 = vadd.f32 %v640, %v698
    %v700 = vpop.f32.mrf.mxu0
    %v701 = vadd.f32 %v640, %v700
    %702 = vmatmul.bf16.gmra.mxu0 %v633
    %v703 = vpop.f32.mrf.mxu0
    %v704 = vadd.f32 %v640, %v703
    %v705 = vpop.f32.mrf.mxu0
    %v706 = vadd.f32 %v640, %v705
    %707 = vmatmul.bf16.gmra.mxu0 %v634
    %v708 = vpop.f32.mrf.mxu0
    %v709 = vadd.f32 %v640, %v708
    %v710 = vpop.f32.mrf.mxu0
    %v711 = vadd.f32 %v640, %v710
    %712 = vmatmul.bf16.gmra.mxu0 %v635
    %v713 = vpop.f32.mrf.mxu0
    %v714 = vadd.f32 %v640, %v713
    %v715 = vpop.f32.mrf.mxu0
    %v716 = vadd.f32 %v640, %v715
    %717 = vmatmul.bf16.gmra.mxu0 %v636
    %v718 = vpop.f32.mrf.mxu0
    %v719 = vadd.f32 %v640, %v718
    %v720 = vpop.f32.mrf.mxu0
    %v721 = vadd.f32 %v640, %v720
    %722 = vmatmul.bf16.gmra.mxu0 %v637
    %v723 = vpop.f32.mrf.mxu0
    %v724 = vadd.f32 %v640, %v723
    %v725 = vpop.f32.mrf.mxu0
    %v726 = vadd.f32 %v640, %v725
    %727 = vmatmul.bf16.gmra.mxu0 %v638
    %v728 = vpop.f32.mrf.mxu0
    %v729 = vadd.f32 %v640, %v728
    %v730 = vpop.f32.mrf.mxu0
    %v731 = vadd.f32 %v640, %v730
    %732 = vmatmul.bf16.gmra.mxu0 %v639
    %v733 = vpop.f32.mrf.mxu0
    %v734 = vadd.f32 %v640, %v733
    %v735 = vpop.f32.mrf.mxu0
    %v736 = vadd.f32 %v640, %v735
    %737 = vdwg.mxu0
    %v738 = vmax.f32 %v699, 0.0
    %v739 = vmax.f32 %v701, 0.0
    %v740 = vmax.f32 %v704, 0.0
    %v741 = vmax.f32 %v706, 0.0
    %v742 = vmax.f32 %v709, 0.0
    %v743 = vmax.f32 %v711, 0.0
    %v744 = vmax.f32 %v714, 0.0
    %v745 = vmax.f32 %v716, 0.0
    %v746 = vmax.f32 %v719, 0.0
    %v747 = vmax.f32 %v721, 0.0
    %v748 = vmax.f32 %v724, 0.0
    %v749 = vmax.f32 %v726, 0.0
    %v750 = vmax.f32 %v729, 0.0
    %v751 = vmax.f32 %v731, 0.0
    %v752 = vmax.f32 %v734, 0.0
    %v753 = vmax.f32 %v736, 0.0
    %v754 = vperm.slane %v107, 0
    %v759 = vunpack.c.l.b16 %v99
    %v760 = vunpack.c.l.b16 %v100
    %v761 = vunpack.c.l.b16 %v101
    %v762 = vunpack.c.l.b16 %v102
    %v763 = vpack.c.b16 %v760, %v759
    %v764 = vpack.c.b16 %v762, %v761
    %767 = vmatpush.bf16.msra.mxu0 0
    %768 = vmatpush.bf16.msra.mxu0 0
    %769 = vmatpush.bf16.msra.mxu0 0
    %770 = vmatpush.bf16.msra.mxu0 0
    %771 = vmatpush.bf16.msra.mxu0 0
    %772 = vmatpush.bf16.msra.mxu0 0
    %773 = vmatpush.bf16.msra.mxu0 %v764
    %774 = vmatpush.bf16.msra.mxu0 %v763
    %775 = vmatmul.bf16.gmra.mxu0 %v162
    %v776 = vpop.f32.mrf.mxu0
    %v777 = vadd.f32 %v754, %v776
    %v778 = vpop.f32.mrf.mxu0
    %v779 = vadd.f32 %v754, %v778
    %780 = vmatmul.bf16.gmra.mxu0 %v165
    %v781 = vpop.f32.mrf.mxu0
    %v782 = vadd.f32 %v754, %v781
    %v783 = vpop.f32.mrf.mxu0
    %v784 = vadd.f32 %v754, %v783
    %785 = vmatmul.bf16.gmra.mxu0 %v168
    %v786 = vpop.f32.mrf.mxu0
    %v787 = vadd.f32 %v754, %v786
    %v788 = vpop.f32.mrf.mxu0
    %v789 = vadd.f32 %v754, %v788
    %790 = vmatmul.bf16.gmra.mxu0 %v171
    %v791 = vpop.f32.mrf.mxu0
    %v792 = vadd.f32 %v754, %v791
    %v793 = vpop.f32.mrf.mxu0
    %v794 = vadd.f32 %v754, %v793
    %795 = vmatmul.bf16.gmra.mxu0 %v174
    %v796 = vpop.f32.mrf.mxu0
    %v797 = vadd.f32 %v754, %v796
    %v798 = vpop.f32.mrf.mxu0
    %v799 = vadd.f32 %v754, %v798
    %800 = vmatmul.bf16.gmra.mxu0 %v177
    %v801 = vpop.f32.mrf.mxu0
    %v802 = vadd.f32 %v754, %v801
    %v803 = vpop.f32.mrf.mxu0
    %v804 = vadd.f32 %v754, %v803
    %805 = vmatmul.bf16.gmra.mxu0 %v180
    %v806 = vpop.f32.mrf.mxu0
    %v807 = vadd.f32 %v754, %v806
    %v808 = vpop.f32.mrf.mxu0
    %v809 = vadd.f32 %v754, %v808
    %810 = vmatmul.bf16.gmra.mxu0 %v183
    %v811 = vpop.f32.mrf.mxu0
    %v812 = vadd.f32 %v754, %v811
    %v813 = vpop.f32.mrf.mxu0
    %v814 = vadd.f32 %v754, %v813
    %815 = vdwg.mxu0
    %v816 = vadd.f32 %v777, %v738
    %v817 = vadd.f32 %v779, %v739
    %v818 = vadd.f32 %v782, %v740
    %v819 = vadd.f32 %v784, %v741
    %v820 = vadd.f32 %v787, %v742
    %v821 = vadd.f32 %v789, %v743
    %v822 = vadd.f32 %v792, %v744
    %v823 = vadd.f32 %v794, %v745
    %v824 = vadd.f32 %v797, %v746
    %v825 = vadd.f32 %v799, %v747
    %v826 = vadd.f32 %v802, %v748
    %v827 = vadd.f32 %v804, %v749
    %v828 = vadd.f32 %v807, %v750
    %v829 = vadd.f32 %v809, %v751
    %v830 = vadd.f32 %v812, %v752
    %v831 = vadd.f32 %v814, %v753
    %vm832 = vcmask 130048
    %833 = vst.msk [vmem:[%s3] sm:$0xff] %vm832, %v816
    %834 = vst.msk [vmem:[%s3 + $0x8] sm:$0xff] %vm832, %v817
    %835 = vst.msk [vmem:[%s3 + $0x10] sm:$0xff] %vm832, %v818
    %836 = vst.msk [vmem:[%s3 + $0x18] sm:$0xff] %vm832, %v819
    %837 = vst.msk [vmem:[%s3 + $0x20] sm:$0xff] %vm832, %v820
    %838 = vst.msk [vmem:[%s3 + $0x28] sm:$0xff] %vm832, %v821
    %839 = vst.msk [vmem:[%s3 + $0x30] sm:$0xff] %vm832, %v822
    %840 = vst.msk [vmem:[%s3 + $0x38] sm:$0xff] %vm832, %v823
    %841 = vst.msk [vmem:[%s3 + $0x40] sm:$0xff] %vm832, %v824
    %842 = vst.msk [vmem:[%s3 + $0x48] sm:$0xff] %vm832, %v825
    %843 = vst.msk [vmem:[%s3 + $0x50] sm:$0xff] %vm832, %v826
    %844 = vst.msk [vmem:[%s3 + $0x58] sm:$0xff] %vm832, %v827
    %845 = vst.msk [vmem:[%s3 + $0x60] sm:$0xff] %vm832, %v828
    %846 = vst.msk [vmem:[%s3 + $0x68] sm:$0xff] %vm832, %v829
    %847 = vst.msk [vmem:[%s3 + $0x70] sm:$0xff] %vm832, %v830
    %848 = vst.msk [vmem:[%s3 + $0x78] sm:$0xff] %vm832, %v831
    // Predicated region
    $region18: #{tpu_custom_call.1} parent=1 // pred_check
      _
    $region19: #{tpu_custom_call.1} parent=1 // pred_check_branch
      %850 = sbr.rel (0) target = $region21
    $region20: #{tpu_custom_call.1} parent=1 // pred_region
      _
    $region21: #{tpu_custom_call.1} parent=1 // pred_fallthru
      _
    // Predicated region
    $region22: #{tpu_custom_call.1} parent=1 // pred_check
      _
    $region23: #{tpu_custom_call.1} parent=1 // pred_check_branch
      %852 = sbr.rel (0) target = $region25
    $region24: #{tpu_custom_call.1} parent=1 // pred_region
      _
    $region25: #{tpu_custom_call.1} parent=1 // pred_fallthru
      _
    %853 = vsyncpa [#allocation3], 1

</llo_original>
